<compile_context>
chip_gen: v5e
topology: v5e:2x2
jax: 0.10.0
libtpu: 0.0.40
codegen_flags: <defaults>
</compile_context>

<pallas_src>
import math

import jax
import jax.numpy as jnp
import numpy as np
from jax.experimental import pallas as pl
from jax.experimental.pallas import tpu as pltpu

SHIFT = math.pi / 2.0


def _defuzz_kernel(c2_ref, s2_ref, out_ref):
    # c2_ref: (6, 3) f32 SMEM — cos^2(theta_shifted/2) for the 6 shifted thetas
    #         (rows 0..2: theta + (pi/2) e_i, rows 3..5: theta - (pi/2) e_i).
    # s2_ref: (6, 3) f32 SMEM — sin^2(theta_shifted/2).
    # out_ref: (3,) f32 SMEM — averaged probabilities of |000>, |001>, |010>.
    p0 = jnp.float32(0.0)
    p1 = jnp.float32(0.0)
    p2 = jnp.float32(0.0)
    for r in range(6):  # static unroll over the 6 shifted evaluations
        ca = c2_ref[r, 0]
        cb = c2_ref[r, 1]
        cc = c2_ref[r, 2]
        sa = s2_ref[r, 0]
        sb = s2_ref[r, 1]
        cbc = cb * cc
        p0 = p0 + ca * cbc          # P(|000>)
        p1 = p1 + sa * cbc          # P(|001>)
        p2 = p2 + ca * sb * cc      # P(|010>)
    inv6 = jnp.float32(1.0 / 6.0)   # mean over i of (p_plus + p_minus)/2
    out_ref[0] = p0 * inv6
    out_ref[1] = p1 * inv6
    out_ref[2] = p2 * inv6


def learnable_defuzz_forward(x, theta):
    """Pallas implementation of LearnableDefuzz.forward.

    x:     (B, D) float32 — only the (static) batch extent matters; the
           reference forward never reads the input values, so x is not an
           operand of the Pallas kernel at all.
    theta: (3,) float32 learnable parameter.
    returns (B, 3) float32.
    """
    B = x.shape[0]
    theta = theta.astype(jnp.float32)

    # Parameter-shift setup (glue, plain JAX): 6 shifted theta vectors and the
    # 18 cos^2 / sin^2 half-angle values (tiny fused elementwise XLA op).
    eye = jnp.eye(3, dtype=jnp.float32)
    theta_shifted = jnp.concatenate(
        [theta[None, :] + SHIFT * eye, theta[None, :] - SHIFT * eye], axis=0
    )  # (6, 3)
    half = theta_shifted * 0.5
    c2 = jnp.square(jnp.cos(half))  # (6, 3)
    s2 = jnp.square(jnp.sin(half))  # (6, 3)

    probs = pl.pallas_call(
        _defuzz_kernel,
        out_shape=jax.ShapeDtypeStruct((3,), jnp.float32),
        in_specs=[
            pl.BlockSpec(memory_space=pltpu.MemorySpace.SMEM),
            pl.BlockSpec(memory_space=pltpu.MemorySpace.SMEM),
        ],
        out_specs=pl.BlockSpec(memory_space=pltpu.MemorySpace.SMEM),
    )(c2, s2)  # (3,) f32

    # Broadcast to the per-sample output in the wrapper (lane-dense work stays
    # out of the kernel; XLA fuses this trivially).
    return jnp.broadcast_to(probs[None, :], (B, 3))


def _reference(theta_np, B):
    """Pure-numpy reproduction of the PyTorch/qiskit forward for verification."""
    th = np.asarray(theta_np, dtype=np.float64)
    outs = []
    for i in range(3):
        acc = None
        for sgn in (+1.0, -1.0):
            t = th.copy()
            t[i] += sgn * (math.pi / 2.0)
            c = np.cos(t / 2.0) ** 2
            s = np.sin(t / 2.0) ** 2
            probs = np.array(
                [c[0] * c[1] * c[2], s[0] * c[1] * c[2], c[0] * s[1] * c[2]]
            )
            acc = probs if acc is None else (acc + probs) / 2.0
        outs.append(acc)
    avg = np.mean(np.stack(outs, axis=0), axis=0)
    return np.tile(avg[None, :], (B, 1)).astype(np.float32)


if __name__ == "__main__":
    key = jax.random.PRNGKey(0)
    k_x, k_theta = jax.random.split(key)

    B, D = 8, 16
    x = jax.random.normal(k_x, (B, D), dtype=jnp.float32)        # layout: (B, D)
    theta = jax.random.normal(k_theta, (3,), dtype=jnp.float32)  # nn.Parameter(randn(3))

    out = learnable_defuzz_forward(x, theta)
    out = jax.block_until_ready(out)

    ref = _reference(np.asarray(theta), B)
    np.testing.assert_allclose(np.asarray(out), ref, rtol=1e-5, atol=1e-6)

    print("KERNEL_OK")
</pallas_src>

<mosaic_0001>
module attributes {stable_mosaic.version = 11 : i64} {
  func.func @_defuzz_kernel(%arg0: memref<6x3xf32, #tpu.memory_space<smem>>, %arg1: memref<6x3xf32, #tpu.memory_space<smem>>, %arg2: memref<3xf32, #tpu.memory_space<smem>>) attributes {dimension_semantics = [], scalar_prefetch = 0 : i64, scratch_operands = 0 : i64, tpu.core_type = #tpu.core_type<tc>} {
    %c0 = arith.constant 0 : index
    %c0_0 = arith.constant 0 : index
    %0 = memref.load %arg0[%c0, %c0_0] : memref<6x3xf32, #tpu.memory_space<smem>>
    %c0_1 = arith.constant 0 : index
    %c1 = arith.constant 1 : index
    %1 = memref.load %arg0[%c0_1, %c1] : memref<6x3xf32, #tpu.memory_space<smem>>
    %c0_2 = arith.constant 0 : index
    %c2 = arith.constant 2 : index
    %2 = memref.load %arg0[%c0_2, %c2] : memref<6x3xf32, #tpu.memory_space<smem>>
    %c0_3 = arith.constant 0 : index
    %c0_4 = arith.constant 0 : index
    %3 = memref.load %arg1[%c0_3, %c0_4] : memref<6x3xf32, #tpu.memory_space<smem>>
    %c0_5 = arith.constant 0 : index
    %c1_6 = arith.constant 1 : index
    %4 = memref.load %arg1[%c0_5, %c1_6] : memref<6x3xf32, #tpu.memory_space<smem>>
    %5 = arith.mulf %1, %2 : f32
    %6 = arith.mulf %0, %5 : f32
    %cst = arith.constant 0.000000e+00 : f32
    %7 = arith.addf %cst, %6 : f32
    %8 = arith.mulf %3, %5 : f32
    %cst_7 = arith.constant 0.000000e+00 : f32
    %9 = arith.addf %cst_7, %8 : f32
    %10 = arith.mulf %0, %4 : f32
    %11 = arith.mulf %10, %2 : f32
    %cst_8 = arith.constant 0.000000e+00 : f32
    %12 = arith.addf %cst_8, %11 : f32
    %c1_9 = arith.constant 1 : index
    %c0_10 = arith.constant 0 : index
    %13 = memref.load %arg0[%c1_9, %c0_10] : memref<6x3xf32, #tpu.memory_space<smem>>
    %c1_11 = arith.constant 1 : index
    %c1_12 = arith.constant 1 : index
    %14 = memref.load %arg0[%c1_11, %c1_12] : memref<6x3xf32, #tpu.memory_space<smem>>
    %c1_13 = arith.constant 1 : index
    %c2_14 = arith.constant 2 : index
    %15 = memref.load %arg0[%c1_13, %c2_14] : memref<6x3xf32, #tpu.memory_space<smem>>
    %c1_15 = arith.constant 1 : index
    %c0_16 = arith.constant 0 : index
    %16 = memref.load %arg1[%c1_15, %c0_16] : memref<6x3xf32, #tpu.memory_space<smem>>
    %c1_17 = arith.constant 1 : index
    %c1_18 = arith.constant 1 : index
    %17 = memref.load %arg1[%c1_17, %c1_18] : memref<6x3xf32, #tpu.memory_space<smem>>
    %18 = arith.mulf %14, %15 : f32
    %19 = arith.mulf %13, %18 : f32
    %20 = arith.addf %7, %19 : f32
    %21 = arith.mulf %16, %18 : f32
    %22 = arith.addf %9, %21 : f32
    %23 = arith.mulf %13, %17 : f32
    %24 = arith.mulf %23, %15 : f32
    %25 = arith.addf %12, %24 : f32
    %c2_19 = arith.constant 2 : index
    %c0_20 = arith.constant 0 : index
    %26 = memref.load %arg0[%c2_19, %c0_20] : memref<6x3xf32, #tpu.memory_space<smem>>
    %c2_21 = arith.constant 2 : index
    %c1_22 = arith.constant 1 : index
    %27 = memref.load %arg0[%c2_21, %c1_22] : memref<6x3xf32, #tpu.memory_space<smem>>
    %c2_23 = arith.constant 2 : index
    %c2_24 = arith.constant 2 : index
    %28 = memref.load %arg0[%c2_23, %c2_24] : memref<6x3xf32, #tpu.memory_space<smem>>
    %c2_25 = arith.constant 2 : index
    %c0_26 = arith.constant 0 : index
    %29 = memref.load %arg1[%c2_25, %c0_26] : memref<6x3xf32, #tpu.memory_space<smem>>
    %c2_27 = arith.constant 2 : index
    %c1_28 = arith.constant 1 : index
    %30 = memref.load %arg1[%c2_27, %c1_28] : memref<6x3xf32, #tpu.memory_space<smem>>
    %31 = arith.mulf %27, %28 : f32
    %32 = arith.mulf %26, %31 : f32
    %33 = arith.addf %20, %32 : f32
    %34 = arith.mulf %29, %31 : f32
    %35 = arith.addf %22, %34 : f32
    %36 = arith.mulf %26, %30 : f32
    %37 = arith.mulf %36, %28 : f32
    %38 = arith.addf %25, %37 : f32
    %c3 = arith.constant 3 : index
    %c0_29 = arith.constant 0 : index
    %39 = memref.load %arg0[%c3, %c0_29] : memref<6x3xf32, #tpu.memory_space<smem>>
    %c3_30 = arith.constant 3 : index
    %c1_31 = arith.constant 1 : index
    %40 = memref.load %arg0[%c3_30, %c1_31] : memref<6x3xf32, #tpu.memory_space<smem>>
    %c3_32 = arith.constant 3 : index
    %c2_33 = arith.constant 2 : index
    %41 = memref.load %arg0[%c3_32, %c2_33] : memref<6x3xf32, #tpu.memory_space<smem>>
    %c3_34 = arith.constant 3 : index
    %c0_35 = arith.constant 0 : index
    %42 = memref.load %arg1[%c3_34, %c0_35] : memref<6x3xf32, #tpu.memory_space<smem>>
    %c3_36 = arith.constant 3 : index
    %c1_37 = arith.constant 1 : index
    %43 = memref.load %arg1[%c3_36, %c1_37] : memref<6x3xf32, #tpu.memory_space<smem>>
    %44 = arith.mulf %40, %41 : f32
    %45 = arith.mulf %39, %44 : f32
    %46 = arith.addf %33, %45 : f32
    %47 = arith.mulf %42, %44 : f32
    %48 = arith.addf %35, %47 : f32
    %49 = arith.mulf %39, %43 : f32
    %50 = arith.mulf %49, %41 : f32
    %51 = arith.addf %38, %50 : f32
    %c4 = arith.constant 4 : index
    %c0_38 = arith.constant 0 : index
    %52 = memref.load %arg0[%c4, %c0_38] : memref<6x3xf32, #tpu.memory_space<smem>>
    %c4_39 = arith.constant 4 : index
    %c1_40 = arith.constant 1 : index
    %53 = memref.load %arg0[%c4_39, %c1_40] : memref<6x3xf32, #tpu.memory_space<smem>>
    %c4_41 = arith.constant 4 : index
    %c2_42 = arith.constant 2 : index
    %54 = memref.load %arg0[%c4_41, %c2_42] : memref<6x3xf32, #tpu.memory_space<smem>>
    %c4_43 = arith.constant 4 : index
    %c0_44 = arith.constant 0 : index
    %55 = memref.load %arg1[%c4_43, %c0_44] : memref<6x3xf32, #tpu.memory_space<smem>>
    %c4_45 = arith.constant 4 : index
    %c1_46 = arith.constant 1 : index
    %56 = memref.load %arg1[%c4_45, %c1_46] : memref<6x3xf32, #tpu.memory_space<smem>>
    %57 = arith.mulf %53, %54 : f32
    %58 = arith.mulf %52, %57 : f32
    %59 = arith.addf %46, %58 : f32
    %60 = arith.mulf %55, %57 : f32
    %61 = arith.addf %48, %60 : f32
    %62 = arith.mulf %52, %56 : f32
    %63 = arith.mulf %62, %54 : f32
    %64 = arith.addf %51, %63 : f32
    %c5 = arith.constant 5 : index
    %c0_47 = arith.constant 0 : index
    %65 = memref.load %arg0[%c5, %c0_47] : memref<6x3xf32, #tpu.memory_space<smem>>
    %c5_48 = arith.constant 5 : index
    %c1_49 = arith.constant 1 : index
    %66 = memref.load %arg0[%c5_48, %c1_49] : memref<6x3xf32, #tpu.memory_space<smem>>
    %c5_50 = arith.constant 5 : index
    %c2_51 = arith.constant 2 : index
    %67 = memref.load %arg0[%c5_50, %c2_51] : memref<6x3xf32, #tpu.memory_space<smem>>
    %c5_52 = arith.constant 5 : index
    %c0_53 = arith.constant 0 : index
    %68 = memref.load %arg1[%c5_52, %c0_53] : memref<6x3xf32, #tpu.memory_space<smem>>
    %c5_54 = arith.constant 5 : index
    %c1_55 = arith.constant 1 : index
    %69 = memref.load %arg1[%c5_54, %c1_55] : memref<6x3xf32, #tpu.memory_space<smem>>
    %70 = arith.mulf %66, %67 : f32
    %71 = arith.mulf %65, %70 : f32
    %72 = arith.addf %59, %71 : f32
    %73 = arith.mulf %68, %70 : f32
    %74 = arith.addf %61, %73 : f32
    %75 = arith.mulf %65, %69 : f32
    %76 = arith.mulf %75, %67 : f32
    %77 = arith.addf %64, %76 : f32
    %cst_56 = arith.constant 0.166666672 : f32
    %78 = arith.mulf %72, %cst_56 : f32
    %c0_57 = arith.constant 0 : index
    %79 = memref.load %arg2[%c0_57] : memref<3xf32, #tpu.memory_space<smem>>
    memref.store %78, %arg2[%c0_57] : memref<3xf32, #tpu.memory_space<smem>>
    %cst_58 = arith.constant 0.166666672 : f32
    %80 = arith.mulf %74, %cst_58 : f32
    %c1_59 = arith.constant 1 : index
    %81 = memref.load %arg2[%c1_59] : memref<3xf32, #tpu.memory_space<smem>>
    memref.store %80, %arg2[%c1_59] : memref<3xf32, #tpu.memory_space<smem>>
    %cst_60 = arith.constant 0.166666672 : f32
    %82 = arith.mulf %77, %cst_60 : f32
    %c2_61 = arith.constant 2 : index
    %83 = memref.load %arg2[%c2_61] : memref<3xf32, #tpu.memory_space<smem>>
    memref.store %82, %arg2[%c2_61] : memref<3xf32, #tpu.memory_space<smem>>
    return
  }
}

</mosaic_0001>

<llo_original>
// kernel: tpu_custom_call.1
$region0: #{tpu_custom_call.1}
  #allocation0 [shape = 'u32[]', space=smem, size = 0x4, offset = 0x4, fixed_abs, tag = 'smem constant byte address 0x4 - core index']
  #allocation1 [shape = 'u32[72,128]{1,0:T(1,128)}', space=vmem, size = 0x9000, scoped, tag = 'internal scratch']
  %s0 = inlined_call_operand.vmem [shape: f32[6,3], index: 0, kind: input, shape index: {}]
  %s1 = inlined_call_operand.vmem [shape: f32[6,3], index: 1, kind: input, shape index: {}]
  %s2 = inlined_call_operand.hbm [shape: f32[3], index: 2, kind: output, shape index: {}]
  %s3 = sld [smem:[#allocation0]]
  $region26: #{tpu_custom_call.1} parent=0
    _
  %s5 = ssub.s32 1, %s3
  %s6 = scalar_select 0, %s5, %s3
  $region1: #{tpu_custom_call.1} parent=0
    #allocation2 [shape = 'u8[4096]{0}', space=smem, size = 0x1000, scoped, tag = 'input window, operand 0, single buffered']
    #allocation3 [shape = 's32[1]{0}', space=sflag, size = 0x4, scoped, tag = 'scoped memory for tpu_custom_call.1']
    #allocation4 [shape = 's32[1]{0}', space=sflag, size = 0x4, scoped, tag = 'scoped memory for tpu_custom_call.1']
    #allocation5 [shape = 'u8[4096]{0}', space=smem, size = 0x1000, scoped, tag = 'input window, operand 1, single buffered']
    #allocation6 [shape = 's32[1]{0}', space=sflag, size = 0x4, scoped, tag = 'scoped memory for tpu_custom_call.1']
    #allocation7 [shape = 'u8[512]{0}', space=smem, size = 0x200, scoped, tag = 'output window, operand 0, single buffered']
    %7 = vsyncpa [#allocation4], 0
    %8 = vsyncpa [#allocation6], 0
    %9 = vsyncpa [#allocation3], 0
    // Predicated region
    $region2: #{tpu_custom_call.1} parent=1 // pred_check
      _
    $region3: #{tpu_custom_call.1} parent=1 // pred_check_branch
      %11 = sbr.rel (0) target = $region5
    $region4: #{tpu_custom_call.1} parent=1 // pred_region
      %13 = vsyncadd [#allocation4], 0
      %s15 = sshll.u32 %s0, 4
      %s16 = int_to_ptr.vmem [resolvable:$true] %s15
      %18 = dma.vmem_to_smem %s16, 128, [#allocation2], [#allocation4]
    $region5: #{tpu_custom_call.1} parent=1 // pred_fallthru
      _
    // Predicated region
    $region6: #{tpu_custom_call.1} parent=1 // pred_check
      _
    $region7: #{tpu_custom_call.1} parent=1 // pred_check_branch
      %20 = sbr.rel (0) target = $region9
    $region8: #{tpu_custom_call.1} parent=1 // pred_region
      %22 = vsyncadd [#allocation6], 0
      %s24 = sshll.u32 %s1, 4
      %s25 = int_to_ptr.vmem [resolvable:$true] %s24
      %27 = dma.vmem_to_smem %s25, 128, [#allocation5], [#allocation6]
    $region9: #{tpu_custom_call.1} parent=1 // pred_fallthru
      _
    // Predicated region
    $region10: #{tpu_custom_call.1} parent=1 // pred_check
      _
    $region11: #{tpu_custom_call.1} parent=1 // pred_check_branch
      %29 = sbr.rel (0) target = $region13
    $region12: #{tpu_custom_call.1} parent=1 // pred_region
      %31 = dma.done [#allocation4], 128
    $region13: #{tpu_custom_call.1} parent=1 // pred_fallthru
      _
    // Predicated region
    $region14: #{tpu_custom_call.1} parent=1 // pred_check
      _
    $region15: #{tpu_custom_call.1} parent=1 // pred_check_branch
      %33 = sbr.rel (0) target = $region17
    $region16: #{tpu_custom_call.1} parent=1 // pred_region
      %35 = dma.done [#allocation6], 128
    $region17: #{tpu_custom_call.1} parent=1 // pred_fallthru
      _
    %36 = sfence
    %s37 = sld [smem:[#allocation2]]
    %s38 = sld [smem:[#allocation2 + $0x1]]
    %s39 = sld [smem:[#allocation2 + $0x2]]
    %s40 = sld [smem:[#allocation5]]
    %s41 = sld [smem:[#allocation5 + $0x1]]
    %s42 = smul.f32 %s38, %s39
    %s43 = smul.f32 %s37, %s42
    %s44 = sadd.f32 %s43, 0.0
    %s45 = smul.f32 %s40, %s42
    %s46 = sadd.f32 %s45, 0.0
    %s47 = smul.f32 %s37, %s41
    %s48 = smul.f32 %s47, %s39
    %s49 = sadd.f32 %s48, 0.0
    %s50 = sld [smem:[#allocation2 + $0x80]]
    %s51 = sld [smem:[#allocation2 + $0x81]]
    %s52 = sld [smem:[#allocation2 + $0x82]]
    %s53 = sld [smem:[#allocation5 + $0x80]]
    %s54 = sld [smem:[#allocation5 + $0x81]]
    %s55 = smul.f32 %s51, %s52
    %s56 = smul.f32 %s50, %s55
    %s57 = sadd.f32 %s44, %s56
    %s58 = smul.f32 %s53, %s55
    %s59 = sadd.f32 %s46, %s58
    %s60 = smul.f32 %s50, %s54
    %s61 = smul.f32 %s60, %s52
    %s62 = sadd.f32 %s49, %s61
    %s63 = sld [smem:[#allocation2 + $0x100]]
    %s64 = sld [smem:[#allocation2 + $0x101]]
    %s65 = sld [smem:[#allocation2 + $0x102]]
    %s66 = sld [smem:[#allocation5 + $0x100]]
    %s67 = sld [smem:[#allocation5 + $0x101]]
    %s68 = smul.f32 %s64, %s65
    %s69 = smul.f32 %s63, %s68
    %s70 = sadd.f32 %s57, %s69
    %s71 = smul.f32 %s66, %s68
    %s72 = sadd.f32 %s59, %s71
    %s73 = smul.f32 %s63, %s67
    %s74 = smul.f32 %s73, %s65
    %s75 = sadd.f32 %s62, %s74
    %s76 = sld [smem:[#allocation2 + $0x180]]
    %s77 = sld [smem:[#allocation2 + $0x181]]
    %s78 = sld [smem:[#allocation2 + $0x182]]
    %s79 = sld [smem:[#allocation5 + $0x180]]
    %s80 = sld [smem:[#allocation5 + $0x181]]
    %s81 = smul.f32 %s77, %s78
    %s82 = smul.f32 %s76, %s81
    %s83 = sadd.f32 %s70, %s82
    %s84 = smul.f32 %s79, %s81
    %s85 = sadd.f32 %s72, %s84
    %s86 = smul.f32 %s76, %s80
    %s87 = smul.f32 %s86, %s78
    %s88 = sadd.f32 %s75, %s87
    %s89 = sld [smem:[#allocation2 + $0x200]]
    %s90 = sld [smem:[#allocation2 + $0x201]]
    %s91 = sld [smem:[#allocation2 + $0x202]]
    %s92 = sld [smem:[#allocation5 + $0x200]]
    %s93 = sld [smem:[#allocation5 + $0x201]]
    %s94 = smul.f32 %s90, %s91
    %s95 = smul.f32 %s89, %s94
    %s96 = sadd.f32 %s83, %s95
    %s97 = smul.f32 %s92, %s94
    %s98 = sadd.f32 %s85, %s97
    %s99 = smul.f32 %s89, %s93
    %s100 = smul.f32 %s99, %s91
    %s101 = sadd.f32 %s88, %s100
    %s102 = sld [smem:[#allocation2 + $0x280]]
    %s103 = sld [smem:[#allocation2 + $0x281]]
    %s104 = sld [smem:[#allocation2 + $0x282]]
    %s105 = sld [smem:[#allocation5 + $0x280]]
    %s106 = sld [smem:[#allocation5 + $0x281]]
    %s107 = smul.f32 %s103, %s104
    %s108 = smul.f32 %s102, %s107
    %s109 = sadd.f32 %s96, %s108
    %s110 = smul.f32 %s105, %s107
    %s111 = sadd.f32 %s98, %s110
    %s112 = smul.f32 %s102, %s106
    %s113 = smul.f32 %s112, %s104
    %s114 = sadd.f32 %s101, %s113
    %s115 = smul.f32 %s109, 0.16666667
    %s116 = scalar_lea.smem [#allocation7], 0
    %117 = sst [smem:[%s116]] %s115
    %s118 = smul.f32 %s111, 0.16666667
    %s119 = scalar_lea.smem [#allocation7], 1
    %120 = sst [smem:[%s119]] %s118
    %s121 = smul.f32 %s114, 0.16666667
    %s122 = scalar_lea.smem [#allocation7], 2
    %123 = sst [smem:[%s122]] %s121
    // Predicated region
    $region18: #{tpu_custom_call.1} parent=1 // pred_check
      _
    $region19: #{tpu_custom_call.1} parent=1 // pred_check_branch
      %125 = sbr.rel (0) target = $region21
    $region20: #{tpu_custom_call.1} parent=1 // pred_region
      %127 = vsyncadd [#allocation3], 0
      %s129 = sshll.u32 %s2, 4
      %s130 = int_to_ptr.hbm [resolvable:$true] %s129
      %132 = dma.smem_to_hbm [#allocation7], 16, %s130, [#allocation3]
    $region21: #{tpu_custom_call.1} parent=1 // pred_fallthru
      _
    // Predicated region
    $region22: #{tpu_custom_call.1} parent=1 // pred_check
      _
    $region23: #{tpu_custom_call.1} parent=1 // pred_check_branch
      %134 = sbr.rel (0) target = $region25
    $region24: #{tpu_custom_call.1} parent=1 // pred_region
      %136 = dma.done [#allocation3], 16
    $region25: #{tpu_custom_call.1} parent=1 // pred_fallthru
      _
    %137 = sfence
    %138 = vsyncpa [#allocation3], 1
    %139 = vsyncpa [#allocation4], 1
    %140 = vsyncpa [#allocation6], 1

</llo_original>
